<compile_context>
chip_gen: v7x
topology: tpu7x:2x2x1
jax: 0.10.0
libtpu: 0.0.40
codegen_flags: <defaults>
</compile_context>

<pallas_src>
import jax
import jax.numpy as jnp
from jax.experimental import pallas as pl
from jax.experimental.pallas import tpu as pltpu

INPUT_DIM = 16
HIDDEN1 = 128
HIDDEN2 = 64
OUTPUT_DIM = 4

SUBLANE = 8       # f32 sublane count
TB_MAX = 2048     # max rows per batch tile


def _round_up(x, m):
    return (x + m - 1) // m * m


def dqn_kernel(x_ref, w1_ref, b1_ref, w2_ref, b2_ref, w3_ref, b3_ref, o_ref):
    """Fused 3-layer MLP for one (TB, in_dim) batch tile: MXU matmuls + VPU ReLU."""
    x = x_ref[...]                                                     # (TB, 16) f32

    # Layer 1: (TB,16)@(16,128) with f32 accumulation, bias + ReLU on VPU.
    h1 = jnp.dot(x, w1_ref[...], preferred_element_type=jnp.float32) + b1_ref[...]
    h1 = jnp.maximum(h1, 0.0)

    # Layer 2: (TB,128)@(128,64)
    h2 = jnp.dot(h1, w2_ref[...], preferred_element_type=jnp.float32) + b2_ref[...]
    h2 = jnp.maximum(h2, 0.0)

    # Layer 3: (TB,64)@(64,4) -> narrow (4-lane) masked store; far cheaper than
    # writing 128 padded lanes back to HBM.
    out = jnp.dot(h2, w3_ref[...], preferred_element_type=jnp.float32) + b3_ref[...]
    o_ref[...] = out.astype(o_ref.dtype)


def _num_tensorcores():
    """Best-effort TensorCore count per chip (v7x has 2, v5e/v6e have 1)."""
    try:
        kind = jax.devices()[0].device_kind.lower()
    except Exception:  # pragma: no cover - defensive
        kind = ""
    return 2 if "v7" in kind else 1


def _pick_tb(batch):
    """Batch tile: big single tiles on 1-TC chips, >=2 tiles on multi-TC chips."""
    b8 = _round_up(batch, SUBLANE)
    n_tc = _num_tensorcores()
    n_tiles = max(n_tc, pl.cdiv(b8, TB_MAX))
    return _round_up(pl.cdiv(b8, n_tiles), SUBLANE)


def prepare_params(params):
    """One-time parameter prep: f32 cast, biases as (1, N) rows.

    Call once and reuse the result across forward calls so weight reshaping /
    casting never shows up on the per-step HBM path.
    """
    prepped = []
    for w, b in params:
        w = jnp.asarray(w, jnp.float32)
        b = jnp.asarray(b, jnp.float32).reshape(1, -1)
        prepped.append((w, b))
    return tuple(prepped)


def dqn_forward(x, prepped_params, *, tb=None):
    """Fused DQN forward pass; returns (B, output_dim) f32 Q-values."""
    (w1, b1), (w2, b2), (w3, b3) = prepped_params
    B, in_dim = x.shape
    out_dim = w3.shape[1]

    TB = tb if tb is not None else _pick_tb(B)
    B_pad = _round_up(B, TB)

    xp = x if B_pad == B else jnp.pad(x, ((0, B_pad - B), (0, 0)))
    grid = (B_pad // TB,)
    resident = lambda i: (0, 0)   # weights/biases stay VMEM-resident across steps

    flops = 2 * B_pad * (in_dim * HIDDEN1 + HIDDEN1 * HIDDEN2 + HIDDEN2 * out_dim)
    bytes_accessed = (
        xp.size * xp.dtype.itemsize
        + sum(a.size * a.dtype.itemsize for a in (w1, b1, w2, b2, w3, b3))
        + B_pad * out_dim * 4
    )

    out = pl.pallas_call(
        dqn_kernel,
        out_shape=jax.ShapeDtypeStruct((B_pad, out_dim), jnp.float32),
        grid=grid,
        in_specs=[
            pl.BlockSpec((TB, in_dim), lambda i: (i, 0)),      # x tile (minor dim = full 16)
            pl.BlockSpec((in_dim, HIDDEN1), resident),         # w1 (16, 128)
            pl.BlockSpec((1, HIDDEN1), resident),              # b1 (1, 128)
            pl.BlockSpec((HIDDEN1, HIDDEN2), resident),        # w2 (128, 64)
            pl.BlockSpec((1, HIDDEN2), resident),              # b2 (1, 64)
            pl.BlockSpec((HIDDEN2, out_dim), resident),        # w3 (64, 4)
            pl.BlockSpec((1, out_dim), resident),              # b3 (1, 4)
        ],
        out_specs=pl.BlockSpec((TB, out_dim), lambda i: (i, 0)),
        compiler_params=pltpu.CompilerParams(
            dimension_semantics=("parallel",),                 # shard tiles on v7x's 2 TCs
        ),
        cost_estimate=pl.CostEstimate(
            flops=flops, transcendentals=0, bytes_accessed=bytes_accessed),
    )(xp, w1, b1, w2, b2, w3, b3)

    return out if B_pad == B else out[:B]


def init_linear(key, fan_in, fan_out):
    # PyTorch nn.Linear default init: U(-1/sqrt(fan_in), 1/sqrt(fan_in))
    kw, kb = jax.random.split(key)
    bound = 1.0 / jnp.sqrt(jnp.float32(fan_in))
    w = jax.random.uniform(kw, (fan_in, fan_out), jnp.float32, -bound, bound)
    b = jax.random.uniform(kb, (fan_out,), jnp.float32, -bound, bound)
    return w, b


def reference_forward(x, prepped_params):
    (w1, b1), (w2, b2), (w3, b3) = prepped_params
    h1 = jnp.maximum(x @ w1 + b1, 0.0)
    h2 = jnp.maximum(h1 @ w2 + b2, 0.0)
    return h2 @ w3 + b3


if __name__ == "__main__":
    input_dim = INPUT_DIM
    output_dim = OUTPUT_DIM

    key = jax.random.PRNGKey(0)
    k_x, k1, k2, k3 = jax.random.split(key, 4)

    params = prepare_params((
        init_linear(k1, input_dim, HIDDEN1),
        init_linear(k2, HIDDEN1, HIDDEN2),
        init_linear(k3, HIDDEN2, output_dim),
    ))

    # Small correctness check (single tiny batch tile), fp32 end-to-end.
    x_small = jax.random.normal(k_x, (8, input_dim), jnp.float32)
    out_small = jax.block_until_ready(dqn_forward(x_small, params))
    ref_small = reference_forward(x_small, params)
    assert out_small.shape == (8, output_dim)
    assert jnp.allclose(out_small, ref_small, atol=1e-5, rtol=1e-5)

    # Gridded / padded-batch check: B=300 not a multiple of the tile size.
    x_big = jax.random.normal(k_x, (300, input_dim), jnp.float32)
    out_big = jax.block_until_ready(dqn_forward(x_big, params))
    ref_big = reference_forward(x_big, params)
    assert out_big.shape == (300, output_dim)
    assert jnp.allclose(out_big, ref_big, atol=1e-4, rtol=1e-4)

    # Explicit multi-tile path (forces >1 grid step regardless of device).
    out_tiled = jax.block_until_ready(dqn_forward(x_big, params, tb=128))
    assert jnp.allclose(out_tiled, ref_big, atol=1e-4, rtol=1e-4)

    print("KERNEL_OK")
</pallas_src>

<mosaic_0001>
module attributes {stable_mosaic.version = 11 : i64} {
  func.func @dqn_kernel(%arg0: i32, %arg1: memref<8x16xf32, #tpu.memory_space<vmem>>, %arg2: memref<16x128xf32, #tpu.memory_space<vmem>>, %arg3: memref<1x128xf32, #tpu.memory_space<vmem>>, %arg4: memref<128x64xf32, #tpu.memory_space<vmem>>, %arg5: memref<1x64xf32, #tpu.memory_space<vmem>>, %arg6: memref<64x4xf32, #tpu.memory_space<vmem>>, %arg7: memref<1x4xf32, #tpu.memory_space<vmem>>, %arg8: memref<8x4xf32, #tpu.memory_space<vmem>>) attributes {dimension_semantics = [#tpu.dimension_semantics<parallel>], iteration_bounds = array<i64: 1>, scalar_prefetch = 0 : i64, scratch_operands = 0 : i64, tpu.core_type = #tpu.core_type<tc>, window_params = [{transform_indices = @transform_0, window_bounds = array<i64: 8, 16>}, {pipeline_mode = #tpu.pipeline_mode<synchronous>, transform_indices = @transform_1, window_bounds = array<i64: 16, 128>}, {pipeline_mode = #tpu.pipeline_mode<synchronous>, transform_indices = @transform_2, window_bounds = array<i64: 1, 128>}, {pipeline_mode = #tpu.pipeline_mode<synchronous>, transform_indices = @transform_3, window_bounds = array<i64: 128, 64>}, {pipeline_mode = #tpu.pipeline_mode<synchronous>, transform_indices = @transform_4, window_bounds = array<i64: 1, 64>}, {pipeline_mode = #tpu.pipeline_mode<synchronous>, transform_indices = @transform_5, window_bounds = array<i64: 64, 4>}, {pipeline_mode = #tpu.pipeline_mode<synchronous>, transform_indices = @transform_6, window_bounds = array<i64: 1, 4>}, {transform_indices = @transform_7, window_bounds = array<i64: 8, 4>}]} {
    %c0 = arith.constant 0 : index
    %c0_0 = arith.constant 0 : index
    %0 = vector.load %arg1[%c0, %c0_0] : memref<8x16xf32, #tpu.memory_space<vmem>>, vector<8x16xf32>
    %c0_1 = arith.constant 0 : index
    %c0_2 = arith.constant 0 : index
    %1 = vector.load %arg2[%c0_1, %c0_2] : memref<16x128xf32, #tpu.memory_space<vmem>>, vector<16x128xf32>
    %cst = arith.constant dense<0.000000e+00> : vector<8x128xf32>
    %2 = tpu.matmul %0, %1, %cst {dimension_numbers = #tpu.dot_dimension_numbers<[1], [0], [0], [1], [0, 0, 1, 1], [], []>} : vector<8x16xf32>, vector<16x128xf32>, vector<8x128xf32> -> vector<8x128xf32>
    %c0_3 = arith.constant 0 : index
    %c0_4 = arith.constant 0 : index
    %3 = vector.load %arg3[%c0_3, %c0_4] : memref<1x128xf32, #tpu.memory_space<vmem>>, vector<1x128xf32>
    %4 = vector.broadcast %3 : vector<1x128xf32> to vector<8x128xf32>
    %5 = arith.addf %2, %4 : vector<8x128xf32>
    %cst_5 = arith.constant 0.000000e+00 : f32
    %6 = vector.broadcast %cst_5 : f32 to vector<8x128xf32>
    %7 = arith.maximumf %5, %6 : vector<8x128xf32>
    %c0_6 = arith.constant 0 : index
    %c0_7 = arith.constant 0 : index
    %8 = vector.load %arg4[%c0_6, %c0_7] : memref<128x64xf32, #tpu.memory_space<vmem>>, vector<128x64xf32>
    %cst_8 = arith.constant dense<0.000000e+00> : vector<8x64xf32>
    %9 = tpu.matmul %7, %8, %cst_8 {dimension_numbers = #tpu.dot_dimension_numbers<[1], [0], [0], [1], [0, 0, 1, 1], [], []>} : vector<8x128xf32>, vector<128x64xf32>, vector<8x64xf32> -> vector<8x64xf32>
    %c0_9 = arith.constant 0 : index
    %c0_10 = arith.constant 0 : index
    %10 = vector.load %arg5[%c0_9, %c0_10] : memref<1x64xf32, #tpu.memory_space<vmem>>, vector<1x64xf32>
    %11 = vector.broadcast %10 : vector<1x64xf32> to vector<8x64xf32>
    %12 = arith.addf %9, %11 : vector<8x64xf32>
    %cst_11 = arith.constant 0.000000e+00 : f32
    %13 = vector.broadcast %cst_11 : f32 to vector<8x64xf32>
    %14 = arith.maximumf %12, %13 : vector<8x64xf32>
    %c0_12 = arith.constant 0 : index
    %c0_13 = arith.constant 0 : index
    %15 = vector.load %arg6[%c0_12, %c0_13] : memref<64x4xf32, #tpu.memory_space<vmem>>, vector<64x4xf32>
    %cst_14 = arith.constant dense<0.000000e+00> : vector<8x4xf32>
    %16 = tpu.matmul %14, %15, %cst_14 {dimension_numbers = #tpu.dot_dimension_numbers<[1], [0], [0], [1], [0, 0, 1, 1], [], []>} : vector<8x64xf32>, vector<64x4xf32>, vector<8x4xf32> -> vector<8x4xf32>
    %c0_15 = arith.constant 0 : index
    %c0_16 = arith.constant 0 : index
    %17 = vector.load %arg7[%c0_15, %c0_16] : memref<1x4xf32, #tpu.memory_space<vmem>>, vector<1x4xf32>
    %18 = vector.broadcast %17 : vector<1x4xf32> to vector<8x4xf32>
    %19 = arith.addf %16, %18 : vector<8x4xf32>
    %c0_17 = arith.constant 0 : index
    %c0_18 = arith.constant 0 : index
    %20 = vector.load %arg8[%c0_17, %c0_18] : memref<8x4xf32, #tpu.memory_space<vmem>>, vector<8x4xf32>
    tpu.vector_store %arg8[%c0_17, %c0_18], %19 {strides = array<i32>} : memref<8x4xf32, #tpu.memory_space<vmem>>, vector<8x4xf32>,
    return
  }
  func.func @transform_0(%arg0: i32) -> (i32, i32) {
    %c0_i32 = arith.constant 0 : i32
    %c0_i32_0 = arith.constant 0 : i32
    return %arg0, %c0_i32 : i32, i32
  }
  func.func @transform_1(%arg0: i32) -> (i32, i32) {
    %c0_i32 = arith.constant 0 : i32
    %c0_i32_0 = arith.constant 0 : i32
    %c0_i32_1 = arith.constant 0 : i32
    return %c0_i32, %c0_i32_0 : i32, i32
  }
  func.func @transform_2(%arg0: i32) -> (i32, i32) {
    %c0_i32 = arith.constant 0 : i32
    %c0_i32_0 = arith.constant 0 : i32
    %c0_i32_1 = arith.constant 0 : i32
    return %c0_i32, %c0_i32_0 : i32, i32
  }
  func.func @transform_3(%arg0: i32) -> (i32, i32) {
    %c0_i32 = arith.constant 0 : i32
    %c0_i32_0 = arith.constant 0 : i32
    %c0_i32_1 = arith.constant 0 : i32
    return %c0_i32, %c0_i32_0 : i32, i32
  }
  func.func @transform_4(%arg0: i32) -> (i32, i32) {
    %c0_i32 = arith.constant 0 : i32
    %c0_i32_0 = arith.constant 0 : i32
    %c0_i32_1 = arith.constant 0 : i32
    return %c0_i32, %c0_i32_0 : i32, i32
  }
  func.func @transform_5(%arg0: i32) -> (i32, i32) {
    %c0_i32 = arith.constant 0 : i32
    %c0_i32_0 = arith.constant 0 : i32
    %c0_i32_1 = arith.constant 0 : i32
    return %c0_i32, %c0_i32_0 : i32, i32
  }
  func.func @transform_6(%arg0: i32) -> (i32, i32) {
    %c0_i32 = arith.constant 0 : i32
    %c0_i32_0 = arith.constant 0 : i32
    %c0_i32_1 = arith.constant 0 : i32
    return %c0_i32, %c0_i32_0 : i32, i32
  }
  func.func @transform_7(%arg0: i32) -> (i32, i32) {
    %c0_i32 = arith.constant 0 : i32
    %c0_i32_0 = arith.constant 0 : i32
    return %arg0, %c0_i32 : i32, i32
  }
}

</mosaic_0001>

<llo_original>
// kernel: tpu_custom_call.1
$region0: #{tpu_custom_call.1}
  #allocation0 [shape = 'u32[]', space=smem, size = 0x4, offset = 0x4, fixed_abs, tag = 'smem constant byte address 0x4 - core index']
  #allocation1 [shape = 'u32[144,128]{1,0:T(1,128)}', space=vmem, size = 0x12000, scoped, tag = 'internal scratch']
  %s0 = inlined_call_operand.vmem [shape: f32[8,16], index: 0, kind: input, shape index: {}]
  %s1 = inlined_call_operand.vmem [shape: f32[16,128], index: 1, kind: input, shape index: {}]
  %s2 = inlined_call_operand.vmem [shape: f32[1,128], index: 2, kind: input, shape index: {}]
  %s3 = inlined_call_operand.vmem [shape: f32[128,64], index: 3, kind: input, shape index: {}]
  %s4 = inlined_call_operand.vmem [shape: f32[1,64], index: 4, kind: input, shape index: {}]
  %s5 = inlined_call_operand.vmem [shape: f32[64,4], index: 5, kind: input, shape index: {}]
  %s6 = inlined_call_operand.vmem [shape: f32[1,4], index: 6, kind: input, shape index: {}]
  %s7 = inlined_call_operand.vmem [shape: f32[8,4], index: 7, kind: output, shape index: {}]
  %s8 = sld [smem:[#allocation0]]
  $region38: #{tpu_custom_call.1} parent=0
    _
  %s10 = ssub.s32 1, %s8
  %s11 = scalar_select 0, %s10, %s8
  // Predicated region
  $region2: #{tpu_custom_call.1} parent=0 // pred_check
    _
  $region3: #{tpu_custom_call.1} parent=0 // pred_check_branch
    %13 = sbr.rel (0) target = $region5
  $region4: #{tpu_custom_call.1} parent=0 // pred_region
    _
  $region5: #{tpu_custom_call.1} parent=0 // pred_fallthru
    _
  // Predicated region
  $region6: #{tpu_custom_call.1} parent=0 // pred_check
    _
  $region7: #{tpu_custom_call.1} parent=0 // pred_check_branch
    %15 = sbr.rel (0) target = $region9
  $region8: #{tpu_custom_call.1} parent=0 // pred_region
    _
  $region9: #{tpu_custom_call.1} parent=0 // pred_fallthru
    _
  // Predicated region
  $region10: #{tpu_custom_call.1} parent=0 // pred_check
    _
  $region11: #{tpu_custom_call.1} parent=0 // pred_check_branch
    %17 = sbr.rel (0) target = $region13
  $region12: #{tpu_custom_call.1} parent=0 // pred_region
    _
  $region13: #{tpu_custom_call.1} parent=0 // pred_fallthru
    _
  // Predicated region
  $region14: #{tpu_custom_call.1} parent=0 // pred_check
    _
  $region15: #{tpu_custom_call.1} parent=0 // pred_check_branch
    %19 = sbr.rel (0) target = $region17
  $region16: #{tpu_custom_call.1} parent=0 // pred_region
    _
  $region17: #{tpu_custom_call.1} parent=0 // pred_fallthru
    _
  // Predicated region
  $region18: #{tpu_custom_call.1} parent=0 // pred_check
    _
  $region19: #{tpu_custom_call.1} parent=0 // pred_check_branch
    %21 = sbr.rel (0) target = $region21
  $region20: #{tpu_custom_call.1} parent=0 // pred_region
    _
  $region21: #{tpu_custom_call.1} parent=0 // pred_fallthru
    _
  // Predicated region
  $region22: #{tpu_custom_call.1} parent=0 // pred_check
    _
  $region23: #{tpu_custom_call.1} parent=0 // pred_check_branch
    %23 = sbr.rel (0) target = $region25
  $region24: #{tpu_custom_call.1} parent=0 // pred_region
    _
  $region25: #{tpu_custom_call.1} parent=0 // pred_fallthru
    _
  // Predicated region
  $region26: #{tpu_custom_call.1} parent=0 // pred_check
    _
  $region27: #{tpu_custom_call.1} parent=0 // pred_check_branch
    %25 = sbr.rel (0) target = $region29
  $region28: #{tpu_custom_call.1} parent=0 // pred_region
    _
  $region29: #{tpu_custom_call.1} parent=0 // pred_fallthru
    _
  %v26 = vld [vmem:[%s0] sm:$0xff]
  %v27 = vld [vmem:[%s1] sm:$0xff]
  %v28 = vld [vmem:[%s1 + $0x8] sm:$0xff]
  %v29 = vld [vmem:[%s2] sm:$0x1]
  %v31 = vlaneseq
  %v32 = vshrl.u32 %v31, 7
  %v33 = vsub.s32 0, %v32
  %v34 = vrot.slane %v29, %v33
  %vm36 = vcmask 130048
  %v38 = vsel %vm36, %v26, 0
  %40 = vmatprep.subr.mxu0 0.0
  %41 = vmatpush1.msra.mxu0 %v27
  %42 = vmatprep.subr.mxu0 0.0
  %43 = vmatpush1.msra.mxu0 %v28
  %44 = vmatprep.subr.mxu0 0.0
  %45 = vmatpush1.msra.mxu0 0.0
  %46 = vmatprep.subr.mxu0 0.0
  %47 = vmatpush1.msra.mxu0 0.0
  %48 = vmatprep.subr.mxu0 0.0
  %49 = vmatpush1.msra.mxu0 0.0
  %50 = vmatprep.subr.mxu0 0.0
  %51 = vmatpush1.msra.mxu0 0.0
  %52 = vmatprep.subr.mxu0 0.0
  %53 = vmatpush1.msra.mxu0 0.0
  %54 = vmatprep.subr.mxu0 0.0
  %55 = vmatpush1.msra.mxu0 0.0
  %56 = vmatprep.subr.mxu0 0.0
  %57 = vmatpush1.msra.mxu0 0.0
  %58 = vmatprep.subr.mxu0 0.0
  %59 = vmatpush1.msra.mxu0 0.0
  %60 = vmatprep.subr.mxu0 0.0
  %61 = vmatpush1.msra.mxu0 0.0
  %62 = vmatprep.subr.mxu0 0.0
  %63 = vmatpush1.msra.mxu0 0.0
  %64 = vmatprep.subr.mxu0 0.0
  %65 = vmatpush1.msra.mxu0 0.0
  %66 = vmatprep.subr.mxu0 0.0
  %67 = vmatpush1.msra.mxu0 0.0
  %68 = vmatprep.subr.mxu0 0.0
  %69 = vmatpush1.msra.mxu0 0.0
  %70 = vmatprep.subr.mxu0 0.0
  %71 = vmatpush1.msra.mxu0 0.0
  %72 = vmatprep.subr.mxu0 0.0
  %73 = vmatpush1.msra.mxu0 0.0
  %74 = vmatprep.subr.mxu0 0.0
  %75 = vmatpush1.msra.mxu0 0.0
  %76 = vmatprep.subr.mxu0 0.0
  %77 = vmatpush1.msra.mxu0 0.0
  %78 = vmatprep.subr.mxu0 0.0
  %79 = vmatpush1.msra.mxu0 0.0
  %80 = vmatprep.subr.mxu0 0.0
  %81 = vmatpush1.msra.mxu0 0.0
  %82 = vmatprep.subr.mxu0 0.0
  %83 = vmatpush1.msra.mxu0 0.0
  %84 = vmatprep.subr.mxu0 0.0
  %85 = vmatpush1.msra.mxu0 0.0
  %86 = vmatprep.subr.mxu0 0.0
  %87 = vmatpush1.msra.mxu0 0.0
  %88 = vmatprep.subr.mxu0 0.0
  %89 = vmatpush1.msra.mxu0 0.0
  %90 = vmatprep.subr.mxu0 0.0
  %91 = vmatpush1.msra.mxu0 0.0
  %92 = vmatprep.subr.mxu0 0.0
  %93 = vmatpush1.msra.mxu0 0.0
  %94 = vmatprep.subr.mxu0 0.0
  %95 = vmatpush1.msra.mxu0 0.0
  %96 = vmatprep.subr.mxu0 0.0
  %97 = vmatpush1.msra.mxu0 0.0
  %98 = vmatprep.subr.mxu0 0.0
  %99 = vmatpush1.msra.mxu0 0.0
  %100 = vmatprep.subr.mxu0 0.0
  %101 = vmatpush1.msra.mxu0 0.0
  %102 = vmatprep.subr.mxu0 0.0
  %103 = vmatpush1.msra.mxu0 0.0
  %104 = vmatprep.mubr.f32.mxu0 0.0
  %105 = vmatmul.mubr.f32.gmra.mrb[0].mxu0 %v38
  %v106 = vpop.f32.mrb[0].mxu0
  %v107 = vadd.f32 %v34, %v106
  %v108 = vpop.f32.mrb[0].mxu0
  %109 = vdwg.mxu0
  %v110 = vmax.f32 %v107, 0.0
  %v111 = vld [vmem:[%s3] sm:$0xff]
  %v112 = vld [vmem:[%s3 + $0x8] sm:$0xff]
  %v113 = vld [vmem:[%s3 + $0x10] sm:$0xff]
  %v114 = vld [vmem:[%s3 + $0x18] sm:$0xff]
  %v115 = vld [vmem:[%s3 + $0x20] sm:$0xff]
  %v116 = vld [vmem:[%s3 + $0x28] sm:$0xff]
  %v117 = vld [vmem:[%s3 + $0x30] sm:$0xff]
  %v118 = vld [vmem:[%s3 + $0x38] sm:$0xff]
  %v119 = vld [vmem:[%s3 + $0x40] sm:$0xff]
  %v120 = vld [vmem:[%s3 + $0x48] sm:$0xff]
  %v121 = vld [vmem:[%s3 + $0x50] sm:$0xff]
  %v122 = vld [vmem:[%s3 + $0x58] sm:$0xff]
  %v123 = vld [vmem:[%s3 + $0x60] sm:$0xff]
  %v124 = vld [vmem:[%s3 + $0x68] sm:$0xff]
  %v125 = vld [vmem:[%s3 + $0x70] sm:$0xff]
  %v126 = vld [vmem:[%s3 + $0x78] sm:$0xff]
  %v127 = vld [vmem:[%s4] sm:$0x1]
  %v129 = vlaneseq
  %v130 = vshrl.u32 %v129, 7
  %v131 = vsub.s32 0, %v130
  %v132 = vrot.slane %v127, %v131
  %134 = vmatprep.subr.mxu0 0.0
  %135 = vmatpush1.msra.mxu0 %v111
  %136 = vmatprep.subr.mxu0 0.0
  %137 = vmatpush1.msra.mxu0 %v112
  %138 = vmatprep.subr.mxu0 0.0
  %139 = vmatpush1.msra.mxu0 %v113
  %140 = vmatprep.subr.mxu0 0.0
  %141 = vmatpush1.msra.mxu0 %v114
  %142 = vmatprep.subr.mxu0 0.0
  %143 = vmatpush1.msra.mxu0 %v115
  %144 = vmatprep.subr.mxu0 0.0
  %145 = vmatpush1.msra.mxu0 %v116
  %146 = vmatprep.subr.mxu0 0.0
  %147 = vmatpush1.msra.mxu0 %v117
  %148 = vmatprep.subr.mxu0 0.0
  %149 = vmatpush1.msra.mxu0 %v118
  %150 = vmatprep.subr.mxu0 0.0
  %151 = vmatpush1.msra.mxu0 %v119
  %152 = vmatprep.subr.mxu0 0.0
  %153 = vmatpush1.msra.mxu0 %v120
  %154 = vmatprep.subr.mxu0 0.0
  %155 = vmatpush1.msra.mxu0 %v121
  %156 = vmatprep.subr.mxu0 0.0
  %157 = vmatpush1.msra.mxu0 %v122
  %158 = vmatprep.subr.mxu0 0.0
  %159 = vmatpush1.msra.mxu0 %v123
  %160 = vmatprep.subr.mxu0 0.0
  %161 = vmatpush1.msra.mxu0 %v124
  %162 = vmatprep.subr.mxu0 0.0
  %163 = vmatpush1.msra.mxu0 %v125
  %164 = vmatprep.subr.mxu0 0.0
  %165 = vmatpush1.msra.mxu0 %v126
  %166 = vmatprep.subr.mxu0 0.0
  %167 = vmatpush1.msra.mxu0 0.0
  %168 = vmatprep.subr.mxu0 0.0
  %169 = vmatpush1.msra.mxu0 0.0
  %170 = vmatprep.subr.mxu0 0.0
  %171 = vmatpush1.msra.mxu0 0.0
  %172 = vmatprep.subr.mxu0 0.0
  %173 = vmatpush1.msra.mxu0 0.0
  %174 = vmatprep.subr.mxu0 0.0
  %175 = vmatpush1.msra.mxu0 0.0
  %176 = vmatprep.subr.mxu0 0.0
  %177 = vmatpush1.msra.mxu0 0.0
  %178 = vmatprep.subr.mxu0 0.0
  %179 = vmatpush1.msra.mxu0 0.0
  %180 = vmatprep.subr.mxu0 0.0
  %181 = vmatpush1.msra.mxu0 0.0
  %182 = vmatprep.subr.mxu0 0.0
  %183 = vmatpush1.msra.mxu0 0.0
  %184 = vmatprep.subr.mxu0 0.0
  %185 = vmatpush1.msra.mxu0 0.0
  %186 = vmatprep.subr.mxu0 0.0
  %187 = vmatpush1.msra.mxu0 0.0
  %188 = vmatprep.subr.mxu0 0.0
  %189 = vmatpush1.msra.mxu0 0.0
  %190 = vmatprep.subr.mxu0 0.0
  %191 = vmatpush1.msra.mxu0 0.0
  %192 = vmatprep.subr.mxu0 0.0
  %193 = vmatpush1.msra.mxu0 0.0
  %194 = vmatprep.subr.mxu0 0.0
  %195 = vmatpush1.msra.mxu0 0.0
  %196 = vmatprep.subr.mxu0 0.0
  %197 = vmatpush1.msra.mxu0 0.0
  %198 = vmatprep.mubr.f32.mxu0 0.0
  %199 = vmatmul.mubr.f32.gmra.mrb[0].mxu0 %v110
  %v200 = vpop.f32.mrb[0].mxu0
  %v201 = vadd.f32 %v132, %v200
  %v202 = vpop.f32.mrb[0].mxu0
  %203 = vdwg.mxu0
  %v204 = vmax.f32 %v201, 0.0
  %v205 = vld [vmem:[%s5] sm:$0xff]
  %v206 = vld [vmem:[%s5 + $0x8] sm:$0xff]
  %v207 = vld [vmem:[%s5 + $0x10] sm:$0xff]
  %v208 = vld [vmem:[%s5 + $0x18] sm:$0xff]
  %v209 = vld [vmem:[%s5 + $0x20] sm:$0xff]
  %v210 = vld [vmem:[%s5 + $0x28] sm:$0xff]
  %v211 = vld [vmem:[%s5 + $0x30] sm:$0xff]
  %v212 = vld [vmem:[%s5 + $0x38] sm:$0xff]
  %v213 = vld [vmem:[%s6] sm:$0x1]
  %v215 = vlaneseq
  %v216 = vshrl.u32 %v215, 7
  %v217 = vsub.s32 0, %v216
  %v218 = vrot.slane %v213, %v217
  %vm220 = vcmask 523264
  %v222 = vsel %vm220, %v204, 0
  %224 = vmatprep.subr.mxu0 0.0
  %225 = vmatpush1.msra.mxu0 %v205
  %226 = vmatprep.subr.mxu0 0.0
  %227 = vmatpush1.msra.mxu0 %v206
  %228 = vmatprep.subr.mxu0 0.0
  %229 = vmatpush1.msra.mxu0 %v207
  %230 = vmatprep.subr.mxu0 0.0
  %231 = vmatpush1.msra.mxu0 %v208
  %232 = vmatprep.subr.mxu0 0.0
  %233 = vmatpush1.msra.mxu0 %v209
  %234 = vmatprep.subr.mxu0 0.0
  %235 = vmatpush1.msra.mxu0 %v210
  %236 = vmatprep.subr.mxu0 0.0
  %237 = vmatpush1.msra.mxu0 %v211
  %238 = vmatprep.subr.mxu0 0.0
  %239 = vmatpush1.msra.mxu0 %v212
  %240 = vmatprep.subr.mxu0 0.0
  %241 = vmatpush1.msra.mxu0 0.0
  %242 = vmatprep.subr.mxu0 0.0
  %243 = vmatpush1.msra.mxu0 0.0
  %244 = vmatprep.subr.mxu0 0.0
  %245 = vmatpush1.msra.mxu0 0.0
  %246 = vmatprep.subr.mxu0 0.0
  %247 = vmatpush1.msra.mxu0 0.0
  %248 = vmatprep.subr.mxu0 0.0
  %249 = vmatpush1.msra.mxu0 0.0
  %250 = vmatprep.subr.mxu0 0.0
  %251 = vmatpush1.msra.mxu0 0.0
  %252 = vmatprep.subr.mxu0 0.0
  %253 = vmatpush1.msra.mxu0 0.0
  %254 = vmatprep.subr.mxu0 0.0
  %255 = vmatpush1.msra.mxu0 0.0
  %256 = vmatprep.subr.mxu0 0.0
  %257 = vmatpush1.msra.mxu0 0.0
  %258 = vmatprep.subr.mxu0 0.0
  %259 = vmatpush1.msra.mxu0 0.0
  %260 = vmatprep.subr.mxu0 0.0
  %261 = vmatpush1.msra.mxu0 0.0
  %262 = vmatprep.subr.mxu0 0.0
  %263 = vmatpush1.msra.mxu0 0.0
  %264 = vmatprep.subr.mxu0 0.0
  %265 = vmatpush1.msra.mxu0 0.0
  %266 = vmatprep.subr.mxu0 0.0
  %267 = vmatpush1.msra.mxu0 0.0
  %268 = vmatprep.subr.mxu0 0.0
  %269 = vmatpush1.msra.mxu0 0.0
  %270 = vmatprep.subr.mxu0 0.0
  %271 = vmatpush1.msra.mxu0 0.0
  %272 = vmatprep.subr.mxu0 0.0
  %273 = vmatpush1.msra.mxu0 0.0
  %274 = vmatprep.subr.mxu0 0.0
  %275 = vmatpush1.msra.mxu0 0.0
  %276 = vmatprep.subr.mxu0 0.0
  %277 = vmatpush1.msra.mxu0 0.0
  %278 = vmatprep.subr.mxu0 0.0
  %279 = vmatpush1.msra.mxu0 0.0
  %280 = vmatprep.subr.mxu0 0.0
  %281 = vmatpush1.msra.mxu0 0.0
  %282 = vmatprep.subr.mxu0 0.0
  %283 = vmatpush1.msra.mxu0 0.0
  %284 = vmatprep.subr.mxu0 0.0
  %285 = vmatpush1.msra.mxu0 0.0
  %286 = vmatprep.subr.mxu0 0.0
  %287 = vmatpush1.msra.mxu0 0.0
  %288 = vmatprep.mubr.f32.mxu0 0.0
  %289 = vmatmul.mubr.f32.gmra.mrb[0].mxu0 %v222
  %v290 = vpop.f32.mrb[0].mxu0
  %v291 = vadd.f32 %v218, %v290
  %v292 = vpop.f32.mrb[0].mxu0
  %293 = vdwg.mxu0
  %vm294 = vcmask 31744
  %295 = vst.msk [vmem:[%s7] sm:$0xff] %vm294, %v291
  // Predicated region
  $region30: #{tpu_custom_call.1} parent=0 // pred_check
    _
  $region31: #{tpu_custom_call.1} parent=0 // pred_check_branch
    %297 = sbr.rel (0) target = $region33
  $region32: #{tpu_custom_call.1} parent=0 // pred_region
    _
  $region33: #{tpu_custom_call.1} parent=0 // pred_fallthru
    _
  // Predicated region
  $region34: #{tpu_custom_call.1} parent=0 // pred_check
    _
  $region35: #{tpu_custom_call.1} parent=0 // pred_check_branch
    %299 = sbr.rel (0) target = $region37
  $region36: #{tpu_custom_call.1} parent=0 // pred_region
    _
  $region37: #{tpu_custom_call.1} parent=0 // pred_fallthru
    _

</llo_original>
